<compile_context>
chip_gen: v7x
topology: tpu7x:2x2x1
jax: 0.10.0
libtpu: 0.0.40
codegen_flags: <defaults>
</compile_context>

<pallas_src>
import jax
import jax.numpy as jnp
import jax.scipy.linalg as jsl
from jax.experimental import pallas as pl
from jax.experimental.pallas import tpu as pltpu

HIDDEN = 32
N_CRITICS = 8
FUSED = N_CRITICS * HIDDEN          # 256 — one wide MXU pass on v6e/v7x


def _round_up(x, m):
    return ((x + m - 1) // m) * m


def _fused_critic_kernel(x_ref, w1_ref, b1_ref,
                         w2_ref, w2b_ref, b2_ref,
                         w3t_ref, b3_ref, out_ref):
    x = x_ref[...]                                   # (TB, S+1) bf16, last col = action
    a = x[:, -1:].astype(jnp.float32)                # (TB, 1)   f32 action column

    # Layer 1, all 8 critics fused along lanes. W1 has a zero row for the
    # action column, so x @ W1 == state @ W1_state exactly.
    q = jnp.dot(x, w1_ref[...], preferred_element_type=jnp.float32) + b1_ref[...]
    q = jnp.maximum(q, 0.0)                          # (TB, 256) f32

    # Layer 2: block-diagonal W2 (q part) + exact rank-1 action term
    #   cat([q_e, a], 1) @ W2_e == q_e @ W2a_e + a * w2b_e   (action_dim == 1)
    q = (jnp.dot(q.astype(jnp.bfloat16), w2_ref[...],
                 preferred_element_type=jnp.float32)
         + a * w2b_ref[...] + b2_ref[...])
    q = jnp.maximum(q, 0.0)                          # (TB, 256) f32

    # Layer 3, lane-dense: (8, 256) @ (TB, 256)^T -> (8, TB) output slab.
    out = jax.lax.dot_general(w3t_ref[...], q.astype(jnp.bfloat16),
                              dimension_numbers=(((1,), (1,)), ((), ())),
                              preferred_element_type=jnp.float32)
    out_ref[...] = out + b3_ref[...]                 # (8, TB) + (8, 1)


def multicri_critic_forward(state, action, fused_params, *, max_tile_b=2048):
    """Returns (B, 8) Q-values: column e == PyTorch's self.l3_e(q_e)."""
    B, S = state.shape
    x = jnp.concatenate([state.astype(jnp.float32),
                         action.reshape(-1, 1).astype(jnp.float32)], axis=1)
    x = x.astype(jnp.bfloat16)                       # (B, S+1) streamed in bf16
    w1f, b1f, w2f, w2bf, b2f, w3t, b3f = fused_params

    # Batch tiling:
    #  * small B: one tile (block == full array, so no 8/128 constraint issues)
    #  * B > 128: tiles are multiples of 128 lanes (lane-dense output stores)
    #    and >= 2 tiles so v7x megacore gets both TensorCores busy.
    if B <= 128:
        tb = _round_up(max(B, 8), 8)
        n_tiles = 1
    else:
        tb = min(max_tile_b, _round_up(-(-B // 2), 128))
        n_tiles = -(-B // tb)
    bp = tb * n_tiles
    if bp != B:
        x = jnp.pad(x, ((0, bp - B), (0, 0)))

    out = pl.pallas_call(
        _fused_critic_kernel,
        out_shape=jax.ShapeDtypeStruct((N_CRITICS, bp), jnp.float32),
        grid_spec=pltpu.PrefetchScalarGridSpec(
            num_scalar_prefetch=0,
            grid=(n_tiles,),
            in_specs=[
                pl.BlockSpec((tb, S + 1), lambda i: (i, 0)),          # [state|action] stream
                pl.BlockSpec((S + 1, FUSED), lambda i: (0, 0)),       # W1 (+ zero action row)
                pl.BlockSpec((1, FUSED), lambda i: (0, 0)),           # b1
                pl.BlockSpec((FUSED, FUSED), lambda i: (0, 0)),       # W2 block-diagonal
                pl.BlockSpec((1, FUSED), lambda i: (0, 0)),           # W2 action row
                pl.BlockSpec((1, FUSED), lambda i: (0, 0)),           # b2
                pl.BlockSpec((N_CRITICS, FUSED), lambda i: (0, 0)),   # W3^T block-diagonal
                pl.BlockSpec((N_CRITICS, 1), lambda i: (0, 0)),       # b3
            ],
            out_specs=pl.BlockSpec((N_CRITICS, tb), lambda i: (0, i)),
        ),
        compiler_params=pltpu.CompilerParams(
            dimension_semantics=("parallel",)),       # batch tiles -> megacore split
    )(x, w1f, b1f, w2f, w2bf, b2f, w3t, b3f)
    return out[:, :B].T                               # (B, 8)


def init_params(key, state_dim, action_dim):
    """Per-critic params mimicking PyTorch nn.Linear init (U(+/- 1/sqrt(fan_in))).

    Weights stored transposed vs. PyTorch (in_features, out_features) so
    forward computes y = x @ W + b.
    """
    assert action_dim == 1  # forward() reshapes action to (-1, 1)
    in2 = HIDDEN + action_dim
    keys = jax.random.split(key, 6)

    def u(k, shape, fan_in):
        bound = 1.0 / jnp.sqrt(jnp.float32(fan_in))
        return jax.random.uniform(k, shape, jnp.float32, -bound, bound)

    w1 = u(keys[0], (N_CRITICS, state_dim, HIDDEN), state_dim)
    b1 = u(keys[1], (N_CRITICS, HIDDEN), state_dim)
    w2 = u(keys[2], (N_CRITICS, in2, HIDDEN), in2)          # full (33, 32) per critic
    b2 = u(keys[3], (N_CRITICS, HIDDEN), in2)
    w3 = u(keys[4], (N_CRITICS, HIDDEN, 1), HIDDEN)
    b3 = u(keys[5], (N_CRITICS, 1), HIDDEN)
    return (w1, b1, w2, b2, w3, b3)


def fuse_params(params):
    """Pack the 8 per-critic MLPs into the lane-fused / block-diagonal layout.

    Matmul weights are cast to bf16 (MXU inputs); biases and the rank-1 action
    row stay f32 (VPU elementwise in f32).
    """
    w1, b1, w2, b2, w3, b3 = params
    S = w1.shape[1]
    w1f = jnp.transpose(w1, (1, 0, 2)).reshape(S, FUSED)            # (S, 256)
    w1f = jnp.concatenate(                                          # (S+1, 256)
        [w1f, jnp.zeros((1, FUSED), jnp.float32)], axis=0)          # zero action row
    b1f = b1.reshape(1, FUSED)                                      # (1, 256)
    w2a = w2[:, :HIDDEN, :]                                         # (8, 32, 32)
    w2b = w2[:, HIDDEN:, :]                                         # (8, 1, 32)
    w2f = jsl.block_diag(*[w2a[e] for e in range(N_CRITICS)])       # (256, 256)
    w2bf = w2b.reshape(1, FUSED)                                    # (1, 256)
    b2f = b2.reshape(1, FUSED)                                      # (1, 256)
    w3t = jsl.block_diag(*[w3[e].T for e in range(N_CRITICS)])      # (8, 256)
    b3f = b3.reshape(N_CRITICS, 1)                                  # (8, 1)
    return (w1f.astype(jnp.bfloat16), b1f,
            w2f.astype(jnp.bfloat16), w2bf, b2f,
            w3t.astype(jnp.bfloat16), b3f)


def reference_forward(state, action, params):
    """Pure-JAX f32 reference replicating the PyTorch forward (stacked as (B, 8))."""
    w1, b1, w2, b2, w3, b3 = params
    a = action.reshape(-1, 1)
    outs = []
    for e in range(N_CRITICS):
        q = jax.nn.relu(state @ w1[e] + b1[e])
        q = jax.nn.relu(jnp.concatenate([q, a], axis=1) @ w2[e] + b2[e])
        outs.append(q @ w3[e] + b3[e])                              # (B, 1)
    return jnp.concatenate(outs, axis=1)                            # (B, 8)


if __name__ == "__main__":
    state_dim = 16
    action_dim = 1      # forward() reshapes action to (-1, 1)
    batch = 8

    key = jax.random.PRNGKey(0)
    k_state, k_action, k_params = jax.random.split(key, 3)

    state = jax.random.normal(k_state, (batch, state_dim), jnp.float32)
    action = jax.random.normal(k_action, (batch,), jnp.float32)
    params = init_params(k_params, state_dim, action_dim)
    fused = fuse_params(params)

    q_kernel = multicri_critic_forward(state, action, fused)
    q_kernel = jax.block_until_ready(q_kernel)

    q_ref = reference_forward(state, action, params)
    assert q_kernel.shape == (batch, N_CRITICS)
    # bf16 MXU inputs -> looser tolerance than the pure-f32 version.
    assert jnp.allclose(q_kernel, q_ref, atol=5e-2, rtol=5e-2), (
        float(jnp.max(jnp.abs(q_kernel - q_ref))))

    # The PyTorch module returns a list of eight (B, 1) tensors; that is just
    # [q_kernel[:, e:e+1] for e in range(8)] on the lane-dense result.
    print("KERNEL_OK")
</pallas_src>

<mosaic_0001>
module attributes {stable_mosaic.version = 11 : i64} {
  func.func @_fused_critic_kernel(%arg0: i32, %arg1: memref<8x17xbf16, #tpu.memory_space<vmem>>, %arg2: memref<17x256xbf16, #tpu.memory_space<vmem>>, %arg3: memref<1x256xf32, #tpu.memory_space<vmem>>, %arg4: memref<256x256xbf16, #tpu.memory_space<vmem>>, %arg5: memref<1x256xf32, #tpu.memory_space<vmem>>, %arg6: memref<1x256xf32, #tpu.memory_space<vmem>>, %arg7: memref<8x256xbf16, #tpu.memory_space<vmem>>, %arg8: memref<8x1xf32, #tpu.memory_space<vmem>>, %arg9: memref<8x8xf32, #tpu.memory_space<vmem>>) attributes {dimension_semantics = [#tpu.dimension_semantics<parallel>], iteration_bounds = array<i64: 1>, scalar_prefetch = 0 : i64, scratch_operands = 0 : i64, tpu.core_type = #tpu.core_type<tc>, window_params = [{transform_indices = @transform_0, window_bounds = array<i64: 8, 17>}, {pipeline_mode = #tpu.pipeline_mode<synchronous>, transform_indices = @transform_1, window_bounds = array<i64: 17, 256>}, {pipeline_mode = #tpu.pipeline_mode<synchronous>, transform_indices = @transform_2, window_bounds = array<i64: 1, 256>}, {pipeline_mode = #tpu.pipeline_mode<synchronous>, transform_indices = @transform_3, window_bounds = array<i64: 256, 256>}, {pipeline_mode = #tpu.pipeline_mode<synchronous>, transform_indices = @transform_4, window_bounds = array<i64: 1, 256>}, {pipeline_mode = #tpu.pipeline_mode<synchronous>, transform_indices = @transform_5, window_bounds = array<i64: 1, 256>}, {pipeline_mode = #tpu.pipeline_mode<synchronous>, transform_indices = @transform_6, window_bounds = array<i64: 8, 256>}, {pipeline_mode = #tpu.pipeline_mode<synchronous>, transform_indices = @transform_7, window_bounds = array<i64: 8, 1>}, {transform_indices = @transform_8, window_bounds = array<i64: 8, 8>}]} {
    %c0 = arith.constant 0 : index
    %c0_0 = arith.constant 0 : index
    %0 = vector.load %arg1[%c0, %c0_0] : memref<8x17xbf16, #tpu.memory_space<vmem>>, vector<8x17xbf16>
    %1 = vector.extract_strided_slice %0 {offsets = [0, 16], sizes = [8, 1], strides = [1, 1]} : vector<8x17xbf16> to vector<8x1xbf16>
    %2 = arith.extf %1 : vector<8x1xbf16> to vector<8x1xf32>
    %c0_1 = arith.constant 0 : index
    %c0_2 = arith.constant 0 : index
    %3 = vector.load %arg2[%c0_1, %c0_2] : memref<17x256xbf16, #tpu.memory_space<vmem>>, vector<17x256xbf16>
    %cst = arith.constant dense<0.000000e+00> : vector<8x256xf32>
    %4 = tpu.matmul %0, %3, %cst {dimension_numbers = #tpu.dot_dimension_numbers<[1], [0], [0], [1], [0, 0, 1, 1], [], []>} : vector<8x17xbf16>, vector<17x256xbf16>, vector<8x256xf32> -> vector<8x256xf32>
    %c0_3 = arith.constant 0 : index
    %c0_4 = arith.constant 0 : index
    %5 = vector.load %arg3[%c0_3, %c0_4] : memref<1x256xf32, #tpu.memory_space<vmem>>, vector<1x256xf32>
    %6 = vector.broadcast %5 : vector<1x256xf32> to vector<8x256xf32>
    %7 = arith.addf %4, %6 : vector<8x256xf32>
    %cst_5 = arith.constant 0.000000e+00 : f32
    %8 = vector.broadcast %cst_5 : f32 to vector<8x256xf32>
    %9 = arith.maximumf %7, %8 : vector<8x256xf32>
    %10 = arith.truncf %9 : vector<8x256xf32> to vector<8x256xbf16>
    %c0_6 = arith.constant 0 : index
    %c0_7 = arith.constant 0 : index
    %11 = vector.load %arg4[%c0_6, %c0_7] : memref<256x256xbf16, #tpu.memory_space<vmem>>, vector<256x256xbf16>
    %cst_8 = arith.constant dense<0.000000e+00> : vector<8x256xf32>
    %12 = tpu.matmul %10, %11, %cst_8 {dimension_numbers = #tpu.dot_dimension_numbers<[1], [0], [0], [1], [0, 0, 1, 1], [], []>} : vector<8x256xbf16>, vector<256x256xbf16>, vector<8x256xf32> -> vector<8x256xf32>
    %c0_9 = arith.constant 0 : index
    %c0_10 = arith.constant 0 : index
    %13 = vector.load %arg5[%c0_9, %c0_10] : memref<1x256xf32, #tpu.memory_space<vmem>>, vector<1x256xf32>
    %14 = vector.broadcast %2 : vector<8x1xf32> to vector<8x256xf32>
    %15 = vector.broadcast %13 : vector<1x256xf32> to vector<8x256xf32>
    %16 = arith.mulf %14, %15 : vector<8x256xf32>
    %17 = arith.addf %12, %16 : vector<8x256xf32>
    %c0_11 = arith.constant 0 : index
    %c0_12 = arith.constant 0 : index
    %18 = vector.load %arg6[%c0_11, %c0_12] : memref<1x256xf32, #tpu.memory_space<vmem>>, vector<1x256xf32>
    %19 = vector.broadcast %18 : vector<1x256xf32> to vector<8x256xf32>
    %20 = arith.addf %17, %19 : vector<8x256xf32>
    %cst_13 = arith.constant 0.000000e+00 : f32
    %21 = vector.broadcast %cst_13 : f32 to vector<8x256xf32>
    %22 = arith.maximumf %20, %21 : vector<8x256xf32>
    %c0_14 = arith.constant 0 : index
    %c0_15 = arith.constant 0 : index
    %23 = vector.load %arg7[%c0_14, %c0_15] : memref<8x256xbf16, #tpu.memory_space<vmem>>, vector<8x256xbf16>
    %24 = arith.truncf %22 : vector<8x256xf32> to vector<8x256xbf16>
    %cst_16 = arith.constant dense<0.000000e+00> : vector<8x8xf32>
    %25 = tpu.matmul %23, %24, %cst_16 {dimension_numbers = #tpu.dot_dimension_numbers<[1], [1], [0], [0], [0, 0, 1, 0], [], []>} : vector<8x256xbf16>, vector<8x256xbf16>, vector<8x8xf32> -> vector<8x8xf32>
    %c0_17 = arith.constant 0 : index
    %c0_18 = arith.constant 0 : index
    %26 = vector.load %arg8[%c0_17, %c0_18] : memref<8x1xf32, #tpu.memory_space<vmem>>, vector<8x1xf32>
    %27 = vector.broadcast %26 : vector<8x1xf32> to vector<8x8xf32>
    %28 = arith.addf %25, %27 : vector<8x8xf32>
    %c0_19 = arith.constant 0 : index
    %c0_20 = arith.constant 0 : index
    %29 = vector.load %arg9[%c0_19, %c0_20] : memref<8x8xf32, #tpu.memory_space<vmem>>, vector<8x8xf32>
    tpu.vector_store %arg9[%c0_19, %c0_20], %28 {strides = array<i32>} : memref<8x8xf32, #tpu.memory_space<vmem>>, vector<8x8xf32>,
    return
  }
  func.func @transform_0(%arg0: i32) -> (i32, i32) {
    %c0_i32 = arith.constant 0 : i32
    %c0_i32_0 = arith.constant 0 : i32
    return %arg0, %c0_i32 : i32, i32
  }
  func.func @transform_1(%arg0: i32) -> (i32, i32) {
    %c0_i32 = arith.constant 0 : i32
    %c0_i32_0 = arith.constant 0 : i32
    %c0_i32_1 = arith.constant 0 : i32
    return %c0_i32, %c0_i32_0 : i32, i32
  }
  func.func @transform_2(%arg0: i32) -> (i32, i32) {
    %c0_i32 = arith.constant 0 : i32
    %c0_i32_0 = arith.constant 0 : i32
    %c0_i32_1 = arith.constant 0 : i32
    return %c0_i32, %c0_i32_0 : i32, i32
  }
  func.func @transform_3(%arg0: i32) -> (i32, i32) {
    %c0_i32 = arith.constant 0 : i32
    %c0_i32_0 = arith.constant 0 : i32
    %c0_i32_1 = arith.constant 0 : i32
    return %c0_i32, %c0_i32_0 : i32, i32
  }
  func.func @transform_4(%arg0: i32) -> (i32, i32) {
    %c0_i32 = arith.constant 0 : i32
    %c0_i32_0 = arith.constant 0 : i32
    %c0_i32_1 = arith.constant 0 : i32
    return %c0_i32, %c0_i32_0 : i32, i32
  }
  func.func @transform_5(%arg0: i32) -> (i32, i32) {
    %c0_i32 = arith.constant 0 : i32
    %c0_i32_0 = arith.constant 0 : i32
    %c0_i32_1 = arith.constant 0 : i32
    return %c0_i32, %c0_i32_0 : i32, i32
  }
  func.func @transform_6(%arg0: i32) -> (i32, i32) {
    %c0_i32 = arith.constant 0 : i32
    %c0_i32_0 = arith.constant 0 : i32
    %c0_i32_1 = arith.constant 0 : i32
    return %c0_i32, %c0_i32_0 : i32, i32
  }
  func.func @transform_7(%arg0: i32) -> (i32, i32) {
    %c0_i32 = arith.constant 0 : i32
    %c0_i32_0 = arith.constant 0 : i32
    %c0_i32_1 = arith.constant 0 : i32
    return %c0_i32, %c0_i32_0 : i32, i32
  }
  func.func @transform_8(%arg0: i32) -> (i32, i32) {
    %c0_i32 = arith.constant 0 : i32
    %c0_i32_0 = arith.constant 0 : i32
    return %c0_i32, %arg0 : i32, i32
  }
}

</mosaic_0001>

<llo_original>
// kernel: tpu_custom_call.1
$region0: #{tpu_custom_call.1}
  #allocation0 [shape = 'u32[]', space=smem, size = 0x4, offset = 0x4, fixed_abs, tag = 'smem constant byte address 0x4 - core index']
  #allocation1 [shape = 'u32[144,128]{1,0:T(1,128)}', space=vmem, size = 0x12000, scoped, tag = 'internal scratch']
  %s0 = inlined_call_operand.vmem [shape: bf16[8,17], index: 0, kind: input, shape index: {}]
  %s1 = inlined_call_operand.hbm [shape: bf16[17,256], index: 1, kind: input, shape index: {}]
  %s2 = inlined_call_operand.vmem [shape: f32[1,256], index: 2, kind: input, shape index: {}]
  %s3 = inlined_call_operand.hbm [shape: bf16[256,256], index: 3, kind: input, shape index: {}]
  %s4 = inlined_call_operand.vmem [shape: f32[1,256], index: 4, kind: input, shape index: {}]
  %s5 = inlined_call_operand.vmem [shape: f32[1,256], index: 5, kind: input, shape index: {}]
  %s6 = inlined_call_operand.vmem [shape: bf16[8,256], index: 6, kind: input, shape index: {}]
  %s7 = inlined_call_operand.vmem [shape: f32[8,1], index: 7, kind: input, shape index: {}]
  %s8 = inlined_call_operand.hbm [shape: f32[8,8], index: 8, kind: output, shape index: {}]
  %s9 = sld [smem:[#allocation0]]
  $region50: #{tpu_custom_call.1} parent=0
    _
  %s11 = ssub.s32 1, %s9
  %s12 = scalar_select 0, %s11, %s9
  $region1: #{tpu_custom_call.1} parent=0
    #allocation2 [shape = 'u8[12288]{0}', space=vmem, size = 0x3000, scoped, tag = 'input window, operand 1, single buffered']
    #allocation3 [shape = 's32[1]{0}', space=sflag, size = 0x4, scoped, tag = 'scoped memory for tpu_custom_call.1']
    #allocation4 [shape = 's32[1]{0}', space=sflag, size = 0x4, scoped, tag = 'scoped memory for tpu_custom_call.1']
    #allocation5 [shape = 'u8[131072]{0}', space=vmem, size = 0x20000, scoped, tag = 'input window, operand 3, single buffered']
    #allocation6 [shape = 's32[1]{0}', space=sflag, size = 0x4, scoped, tag = 'scoped memory for tpu_custom_call.1']
    #allocation7 [shape = 'u8[4096]{0}', space=vmem, size = 0x1000, scoped, tag = 'output window, operand 0, single buffered']
    %13 = vsyncpa [#allocation3], 0
    %14 = vsyncpa [#allocation6], 0
    %15 = vsyncpa [#allocation4], 0
    // Predicated region
    $region2: #{tpu_custom_call.1} parent=1 // pred_check
      _
    $region3: #{tpu_custom_call.1} parent=1 // pred_check_branch
      %17 = sbr.rel (0) target = $region5
    $region4: #{tpu_custom_call.1} parent=1 // pred_region
      _
    $region5: #{tpu_custom_call.1} parent=1 // pred_fallthru
      _
    // Predicated region
    $region6: #{tpu_custom_call.1} parent=1 // pred_check
      _
    $region7: #{tpu_custom_call.1} parent=1 // pred_check_branch
      %19 = sbr.rel (0) target = $region9
    $region8: #{tpu_custom_call.1} parent=1 // pred_region
      %s21 = ssub.s32 384, 384
      %22 = vsyncadd [#allocation3], %s21
      %s23 = sshll.u32 [#allocation2], 4
      %s24 = int_to_ptr.vmem [resolvable:$true] %s23
      %29 = dma.hbm_to_vmem [thread:$0]  %s1, 384, %s24, [#allocation3], 128, 128, 8
    $region9: #{tpu_custom_call.1} parent=1 // pred_fallthru
      _
    // Predicated region
    $region10: #{tpu_custom_call.1} parent=1 // pred_check
      _
    $region11: #{tpu_custom_call.1} parent=1 // pred_check_branch
      %31 = sbr.rel (0) target = $region13
    $region12: #{tpu_custom_call.1} parent=1 // pred_region
      _
    $region13: #{tpu_custom_call.1} parent=1 // pred_fallthru
      _
    // Predicated region
    $region14: #{tpu_custom_call.1} parent=1 // pred_check
      _
    $region15: #{tpu_custom_call.1} parent=1 // pred_check_branch
      %33 = sbr.rel (0) target = $region17
    $region16: #{tpu_custom_call.1} parent=1 // pred_region
      %s35 = ssub.s32 4096, 4096
      %36 = vsyncadd [#allocation6], %s35
      %s37 = sshll.u32 [#allocation5], 4
      %s38 = int_to_ptr.vmem [resolvable:$true] %s37
      %43 = dma.hbm_to_vmem [thread:$0]  %s3, 4096, %s38, [#allocation6], 128, 128, 8
    $region17: #{tpu_custom_call.1} parent=1 // pred_fallthru
      _
    // Predicated region
    $region18: #{tpu_custom_call.1} parent=1 // pred_check
      _
    $region19: #{tpu_custom_call.1} parent=1 // pred_check_branch
      %45 = sbr.rel (0) target = $region21
    $region20: #{tpu_custom_call.1} parent=1 // pred_region
      _
    $region21: #{tpu_custom_call.1} parent=1 // pred_fallthru
      _
    // Predicated region
    $region22: #{tpu_custom_call.1} parent=1 // pred_check
      _
    $region23: #{tpu_custom_call.1} parent=1 // pred_check_branch
      %47 = sbr.rel (0) target = $region25
    $region24: #{tpu_custom_call.1} parent=1 // pred_region
      _
    $region25: #{tpu_custom_call.1} parent=1 // pred_fallthru
      _
    // Predicated region
    $region26: #{tpu_custom_call.1} parent=1 // pred_check
      _
    $region27: #{tpu_custom_call.1} parent=1 // pred_check_branch
      %49 = sbr.rel (0) target = $region29
    $region28: #{tpu_custom_call.1} parent=1 // pred_region
      _
    $region29: #{tpu_custom_call.1} parent=1 // pred_fallthru
      _
    // Predicated region
    $region30: #{tpu_custom_call.1} parent=1 // pred_check
      _
    $region31: #{tpu_custom_call.1} parent=1 // pred_check_branch
      %51 = sbr.rel (0) target = $region33
    $region32: #{tpu_custom_call.1} parent=1 // pred_region
      _
    $region33: #{tpu_custom_call.1} parent=1 // pred_fallthru
      _
    // Predicated region
    $region34: #{tpu_custom_call.1} parent=1 // pred_check
      _
    $region35: #{tpu_custom_call.1} parent=1 // pred_check_branch
      %53 = sbr.rel (0) target = $region37
    $region36: #{tpu_custom_call.1} parent=1 // pred_region
      %54 = dma.done [#allocation3], 384
    $region37: #{tpu_custom_call.1} parent=1 // pred_fallthru
      _
    // Predicated region
    $region38: #{tpu_custom_call.1} parent=1 // pred_check
      _
    $region39: #{tpu_custom_call.1} parent=1 // pred_check_branch
      %56 = sbr.rel (0) target = $region41
    $region40: #{tpu_custom_call.1} parent=1 // pred_region
      %57 = dma.done [#allocation6], 4096
    $region41: #{tpu_custom_call.1} parent=1 // pred_fallthru
      _
    %v59 = vld [vmem:[%s0] sm:$0xf]
    %v60 = vunpack.c.l.bf16 %v59
    %v61 = vld [vmem:[#allocation2] sm:$0xff]
    %v62 = vld [vmem:[#allocation2 + $0x8] sm:$0xff]
    %v63 = vld [vmem:[#allocation2 + $0x10] sm:$0x11]
    %v64 = vld [vmem:[%s2] sm:$0x3]
    %v66 = vlaneseq
    %v67 = vshrl.u32 %v66, 7
    %v68 = vsub.s32 0, %v67
    %v69 = vrot.slane %v64, %v68
    %v70 = vlaneseq
    %v71 = vshrl.u32 %v70, 7
    %v72 = vsub.s32 1, %v71
    %v73 = vrot.slane %v64, %v72
    %v79 = vunpack.c.l.b16 %v61
    %v80 = vunpack.c.h.b16 %v61
    %v81 = vunpack.c.l.b16 %v62
    %v82 = vunpack.c.h.b16 %v62
    %v83 = vunpack.c.l.b16 %v63
    %v84 = vunpack.c.h.b16 %v63
    %v85 = vpack.c.b16 %v81, %v79
    %v86 = vpack.c.b16 %v82, %v80
    %v87 = vpack.c.b16 %v83, %v83
    %v88 = vpack.c.b16 %v84, %v84
    %vm91 = vcmask 138240
    %v93 = vsel %vm91, %v59, 0
    %vm95 = vcmask 1040384
    %v96 = vsel 0, 4294967295, 65535
    %v97 = vsel %vm95, %v96, 0
    %v99 = vand.u32 %v87, %v97
    %v102 = vand.u32 %v88, %v97
    %104 = vmatprep.subr.bf16.mxu0 %v86
    %105 = vmatpush1.bf16.msra.mxu0 %v85
    %106 = vmatprep.subr.bf16.mxu0 %v102
    %107 = vmatpush1.bf16.msra.mxu0 %v99
    %108 = vmatprep.subr.bf16.mxu0 0
    %109 = vmatpush1.bf16.msra.mxu0 0
    %110 = vmatprep.subr.bf16.mxu0 0
    %111 = vmatpush1.bf16.msra.mxu0 0
    %112 = vmatprep.subr.bf16.mxu0 0
    %113 = vmatpush1.bf16.msra.mxu0 0
    %114 = vmatprep.subr.bf16.mxu0 0
    %115 = vmatpush1.bf16.msra.mxu0 0
    %116 = vmatprep.subr.bf16.mxu0 0
    %117 = vmatpush1.bf16.msra.mxu0 0
    %118 = vmatprep.subr.bf16.mxu0 0
    %119 = vmatpush1.bf16.msra.mxu0 0
    %120 = vmatprep.subr.bf16.mxu0 0
    %121 = vmatpush1.bf16.msra.mxu0 0
    %122 = vmatprep.subr.bf16.mxu0 0
    %123 = vmatpush1.bf16.msra.mxu0 0
    %124 = vmatprep.subr.bf16.mxu0 0
    %125 = vmatpush1.bf16.msra.mxu0 0
    %126 = vmatprep.subr.bf16.mxu0 0
    %127 = vmatpush1.bf16.msra.mxu0 0
    %128 = vmatprep.subr.bf16.mxu0 0
    %129 = vmatpush1.bf16.msra.mxu0 0
    %130 = vmatprep.subr.bf16.mxu0 0
    %131 = vmatpush1.bf16.msra.mxu0 0
    %132 = vmatprep.subr.bf16.mxu0 0
    %133 = vmatpush1.bf16.msra.mxu0 0
    %134 = vmatprep.subr.bf16.mxu0 0
    %135 = vmatpush1.bf16.msra.mxu0 0
    %136 = vmatprep.mubr.bf16.mxu0 0
    %137 = vmatmul.mubr.bf16.gmra.mrb[0].mxu0 %v93
    %v138 = vpop.f32.mrb[0].mxu0
    %v139 = vadd.f32 %v69, %v138
    %v140 = vpop.f32.mrb[0].mxu0
    %v141 = vadd.f32 %v73, %v140
    %v142 = vpop.f32.mrb[0].mxu0
    %v143 = vpop.f32.mrb[0].mxu0
    %144 = vdwg.mxu0
    %v145 = vmax.f32 %v139, 0.0
    %v146 = vmax.f32 %v141, 0.0
    %v147 = vpack.c.bf16 %v145, %v145
    %v148 = vpack.c.bf16 %v146, %v146
    %v149 = vld [vmem:[#allocation5] sm:$0xff]
    %v150 = vld [vmem:[#allocation5 + $0x8] sm:$0xff]
    %v151 = vld [vmem:[#allocation5 + $0x10] sm:$0xff]
    %v152 = vld [vmem:[#allocation5 + $0x18] sm:$0xff]
    %v153 = vld [vmem:[#allocation5 + $0x20] sm:$0xff]
    %v154 = vld [vmem:[#allocation5 + $0x28] sm:$0xff]
    %v155 = vld [vmem:[#allocation5 + $0x30] sm:$0xff]
    %v156 = vld [vmem:[#allocation5 + $0x38] sm:$0xff]
    %v157 = vld [vmem:[#allocation5 + $0x40] sm:$0xff]
    %v158 = vld [vmem:[#allocation5 + $0x48] sm:$0xff]
    %v159 = vld [vmem:[#allocation5 + $0x50] sm:$0xff]
    %v160 = vld [vmem:[#allocation5 + $0x58] sm:$0xff]
    %v161 = vld [vmem:[#allocation5 + $0x60] sm:$0xff]
    %v162 = vld [vmem:[#allocation5 + $0x68] sm:$0xff]
    %v163 = vld [vmem:[#allocation5 + $0x70] sm:$0xff]
    %v164 = vld [vmem:[#allocation5 + $0x78] sm:$0xff]
    %v165 = vld [vmem:[#allocation5 + $0x80] sm:$0xff]
    %v166 = vld [vmem:[#allocation5 + $0x88] sm:$0xff]
    %v167 = vld [vmem:[#allocation5 + $0x90] sm:$0xff]
    %v168 = vld [vmem:[#allocation5 + $0x98] sm:$0xff]
    %v169 = vld [vmem:[#allocation5 + $0xa0] sm:$0xff]
    %v170 = vld [vmem:[#allocation5 + $0xa8] sm:$0xff]
    %v171 = vld [vmem:[#allocation5 + $0xb0] sm:$0xff]
    %v172 = vld [vmem:[#allocation5 + $0xb8] sm:$0xff]
    %v173 = vld [vmem:[#allocation5 + $0xc0] sm:$0xff]
    %v174 = vld [vmem:[#allocation5 + $0xc8] sm:$0xff]
    %v175 = vld [vmem:[#allocation5 + $0xd0] sm:$0xff]
    %v176 = vld [vmem:[#allocation5 + $0xd8] sm:$0xff]
    %v177 = vld [vmem:[#allocation5 + $0xe0] sm:$0xff]
    %v178 = vld [vmem:[#allocation5 + $0xe8] sm:$0xff]
    %v179 = vld [vmem:[#allocation5 + $0xf0] sm:$0xff]
    %v180 = vld [vmem:[#allocation5 + $0xf8] sm:$0xff]
    %v181 = vld [vmem:[%s4] sm:$0x3]
    %183 = vset.pattern.permute.xlu0 16
    %184 = vperm.xlu0 %183, %v60
    %v185 = vpop.permute.xlu0 %184
    %v188 = vlaneseq
    %v189 = vshrl.u32 %v188, 7
    %v190 = vsub.s32 0, %v189
    %v191 = vrot.slane %v181, %v190
    %v192 = vlaneseq
    %v193 = vshrl.u32 %v192, 7
    %v194 = vsub.s32 1, %v193
    %v195 = vrot.slane %v181, %v194
    %v198 = vmul.f32 %v185, %v191
    %v199 = vmul.f32 %v185, %v195
    %v232 = vunpack.c.l.b16 %v149
    %v233 = vunpack.c.h.b16 %v149
    %v234 = vunpack.c.l.b16 %v150
    %v235 = vunpack.c.h.b16 %v150
    %v236 = vunpack.c.l.b16 %v151
    %v237 = vunpack.c.h.b16 %v151
    %v238 = vunpack.c.l.b16 %v152
    %v239 = vunpack.c.h.b16 %v152
    %v240 = vunpack.c.l.b16 %v153
    %v241 = vunpack.c.h.b16 %v153
    %v242 = vunpack.c.l.b16 %v154
    %v243 = vunpack.c.h.b16 %v154
    %v244 = vunpack.c.l.b16 %v155
    %v245 = vunpack.c.h.b16 %v155
    %v246 = vunpack.c.l.b16 %v156
    %v247 = vunpack.c.h.b16 %v156
    %v248 = vunpack.c.l.b16 %v157
    %v249 = vunpack.c.h.b16 %v157
    %v250 = vunpack.c.l.b16 %v158
    %v251 = vunpack.c.h.b16 %v158
    %v252 = vunpack.c.l.b16 %v159
    %v253 = vunpack.c.h.b16 %v159
    %v254 = vunpack.c.l.b16 %v160
    %v255 = vunpack.c.h.b16 %v160
    %v256 = vunpack.c.l.b16 %v161
    %v257 = vunpack.c.h.b16 %v161
    %v258 = vunpack.c.l.b16 %v162
    %v259 = vunpack.c.h.b16 %v162
    %v260 = vunpack.c.l.b16 %v163
    %v261 = vunpack.c.h.b16 %v163
    %v262 = vunpack.c.l.b16 %v164
    %v263 = vunpack.c.h.b16 %v164
    %v264 = vunpack.c.l.b16 %v165
    %v265 = vunpack.c.h.b16 %v165
    %v266 = vunpack.c.l.b16 %v166
    %v267 = vunpack.c.h.b16 %v166
    %v268 = vunpack.c.l.b16 %v167
    %v269 = vunpack.c.h.b16 %v167
    %v270 = vunpack.c.l.b16 %v168
    %v271 = vunpack.c.h.b16 %v168
    %v272 = vunpack.c.l.b16 %v169
    %v273 = vunpack.c.h.b16 %v169
    %v274 = vunpack.c.l.b16 %v170
    %v275 = vunpack.c.h.b16 %v170
    %v276 = vunpack.c.l.b16 %v171
    %v277 = vunpack.c.h.b16 %v171
    %v278 = vunpack.c.l.b16 %v172
    %v279 = vunpack.c.h.b16 %v172
    %v280 = vunpack.c.l.b16 %v173
    %v281 = vunpack.c.h.b16 %v173
    %v282 = vunpack.c.l.b16 %v174
    %v283 = vunpack.c.h.b16 %v174
    %v284 = vunpack.c.l.b16 %v175
    %v285 = vunpack.c.h.b16 %v175
    %v286 = vunpack.c.l.b16 %v176
    %v287 = vunpack.c.h.b16 %v176
    %v288 = vunpack.c.l.b16 %v177
    %v289 = vunpack.c.h.b16 %v177
    %v290 = vunpack.c.l.b16 %v178
    %v291 = vunpack.c.h.b16 %v178
    %v292 = vunpack.c.l.b16 %v179
    %v293 = vunpack.c.h.b16 %v179
    %v294 = vunpack.c.l.b16 %v180
    %v295 = vunpack.c.h.b16 %v180
    %v296 = vpack.c.b16 %v234, %v232
    %v297 = vpack.c.b16 %v235, %v233
    %v298 = vpack.c.b16 %v238, %v236
    %v299 = vpack.c.b16 %v239, %v237
    %v300 = vpack.c.b16 %v242, %v240
    %v301 = vpack.c.b16 %v243, %v241
    %v302 = vpack.c.b16 %v246, %v244
    %v303 = vpack.c.b16 %v247, %v245
    %v304 = vpack.c.b16 %v250, %v248
    %v305 = vpack.c.b16 %v251, %v249
    %v306 = vpack.c.b16 %v254, %v252
    %v307 = vpack.c.b16 %v255, %v253
    %v308 = vpack.c.b16 %v258, %v256
    %v309 = vpack.c.b16 %v259, %v257
    %v310 = vpack.c.b16 %v262, %v260
    %v311 = vpack.c.b16 %v263, %v261
    %v312 = vpack.c.b16 %v266, %v264
    %v313 = vpack.c.b16 %v267, %v265
    %v314 = vpack.c.b16 %v270, %v268
    %v315 = vpack.c.b16 %v271, %v269
    %v316 = vpack.c.b16 %v274, %v272
    %v317 = vpack.c.b16 %v275, %v273
    %v318 = vpack.c.b16 %v278, %v276
    %v319 = vpack.c.b16 %v279, %v277
    %v320 = vpack.c.b16 %v282, %v280
    %v321 = vpack.c.b16 %v283, %v281
    %v322 = vpack.c.b16 %v286, %v284
    %v323 = vpack.c.b16 %v287, %v285
    %v324 = vpack.c.b16 %v290, %v288
    %v325 = vpack.c.b16 %v291, %v289
    %v326 = vpack.c.b16 %v294, %v292
    %v327 = vpack.c.b16 %v295, %v293
    %360 = vmatprep.subr.bf16.mxu0 %v297
    %361 = vmatpush1.bf16.msra.mxu0 %v296
    %362 = vmatprep.subr.bf16.mxu0 %v299
    %363 = vmatpush1.bf16.msra.mxu0 %v298
    %364 = vmatprep.subr.bf16.mxu0 %v301
    %365 = vmatpush1.bf16.msra.mxu0 %v300
    %366 = vmatprep.subr.bf16.mxu0 %v303
    %367 = vmatpush1.bf16.msra.mxu0 %v302
    %368 = vmatprep.subr.bf16.mxu0 %v305
    %369 = vmatpush1.bf16.msra.mxu0 %v304
    %370 = vmatprep.subr.bf16.mxu0 %v307
    %371 = vmatpush1.bf16.msra.mxu0 %v306
    %372 = vmatprep.subr.bf16.mxu0 %v309
    %373 = vmatpush1.bf16.msra.mxu0 %v308
    %374 = vmatprep.subr.bf16.mxu0 %v311
    %375 = vmatpush1.bf16.msra.mxu0 %v310
    %376 = vmatprep.subr.bf16.mxu0 %v313
    %377 = vmatpush1.bf16.msra.mxu0 %v312
    %378 = vmatprep.subr.bf16.mxu0 %v315
    %379 = vmatpush1.bf16.msra.mxu0 %v314
    %380 = vmatprep.subr.bf16.mxu0 %v317
    %381 = vmatpush1.bf16.msra.mxu0 %v316
    %382 = vmatprep.subr.bf16.mxu0 %v319
    %383 = vmatpush1.bf16.msra.mxu0 %v318
    %384 = vmatprep.subr.bf16.mxu0 %v321
    %385 = vmatpush1.bf16.msra.mxu0 %v320
    %386 = vmatprep.subr.bf16.mxu0 %v323
    %387 = vmatpush1.bf16.msra.mxu0 %v322
    %388 = vmatprep.subr.bf16.mxu0 %v325
    %389 = vmatpush1.bf16.msra.mxu0 %v324
    %390 = vmatprep.subr.bf16.mxu0 %v327
    %391 = vmatpush1.bf16.msra.mxu0 %v326
    %392 = vmatprep.mubr.bf16.mxu0 %v148
    %393 = vmatmul.mubr.bf16.gmra.mrb[0].mxu0 %v147
    %v394 = vpop.f32.mrb[0].mxu0
    %v395 = vadd.f32 %v198, %v394
    %v396 = vpop.f32.mrb[0].mxu0
    %v397 = vadd.f32 %v199, %v396
    %v398 = vpop.f32.mrb[0].mxu0
    %v399 = vpop.f32.mrb[0].mxu0
    %400 = vdwg.mxu0
    %v401 = vld [vmem:[%s5] sm:$0x3]
    %v403 = vlaneseq
    %v404 = vshrl.u32 %v403, 7
    %v405 = vsub.s32 0, %v404
    %v406 = vrot.slane %v401, %v405
    %v407 = vlaneseq
    %v408 = vshrl.u32 %v407, 7
    %v409 = vsub.s32 1, %v408
    %v410 = vrot.slane %v401, %v409
    %v413 = vadd.f32 %v395, %v406
    %v414 = vadd.f32 %v397, %v410
    %v415 = vmax.f32 %v413, 0.0
    %v416 = vmax.f32 %v414, 0.0
    %v417 = vld [vmem:[%s6] sm:$0xff]
    %v418 = vpack.c.bf16 %v415, %v415
    %v419 = vpack.c.bf16 %v416, %v416
    %v420 = vld [vmem:[%s7] sm:$0xff]
    %422 = vset.pattern.permute.xlu0 0
    %423 = vperm.xlu0 %422, %v420
    %v424 = vpop.permute.xlu0 %423
    %v427 = vunpack.c.l.b16 %v417
    %v428 = vunpack.c.h.b16 %v417
    %v429 = vpack.c.b16 %v427, %v427
    %v430 = vpack.c.b16 %v428, %v428
    %433 = vmatprep.subr.bf16.mxu0 %v419
    %434 = vmatpush1.bf16.xpose.msra.mxu0 %v418
    %435 = vmatprep.subr.bf16.mxu0 0
    %436 = vmatpush1.bf16.xpose.msra.mxu0 0
    %437 = vmatprep.subr.bf16.mxu0 0
    %438 = vmatpush1.bf16.xpose.msra.mxu0 0
    %439 = vmatprep.subr.bf16.mxu0 0
    %440 = vmatpush1.bf16.xpose.msra.mxu0 0
    %441 = vmatprep.subr.bf16.mxu0 0
    %442 = vmatpush1.bf16.xpose.msra.mxu0 0
    %443 = vmatprep.subr.bf16.mxu0 0
    %444 = vmatpush1.bf16.xpose.msra.mxu0 0
    %445 = vmatprep.subr.bf16.mxu0 0
    %446 = vmatpush1.bf16.xpose.msra.mxu0 0
    %447 = vmatprep.subr.bf16.mxu0 0
    %448 = vmatpush1.bf16.xpose.msra.mxu0 0
    %449 = vmatprep.subr.bf16.mxu0 0
    %450 = vmatpush1.bf16.xpose.msra.mxu0 0
    %451 = vmatprep.subr.bf16.mxu0 0
    %452 = vmatpush1.bf16.xpose.msra.mxu0 0
    %453 = vmatprep.subr.bf16.mxu0 0
    %454 = vmatpush1.bf16.xpose.msra.mxu0 0
    %455 = vmatprep.subr.bf16.mxu0 0
    %456 = vmatpush1.bf16.xpose.msra.mxu0 0
    %457 = vmatprep.subr.bf16.mxu0 0
    %458 = vmatpush1.bf16.xpose.msra.mxu0 0
    %459 = vmatprep.subr.bf16.mxu0 0
    %460 = vmatpush1.bf16.xpose.msra.mxu0 0
    %461 = vmatprep.subr.bf16.mxu0 0
    %462 = vmatpush1.bf16.xpose.msra.mxu0 0
    %463 = vmatprep.subr.bf16.mxu0 0
    %464 = vmatpush1.bf16.xpose.msra.mxu0 0
    %465 = vmatprep.mubr.bf16.mxu0 %v430
    %466 = vmatmul.mubr.bf16.gmra.mrb[0].mxu0 %v429
    %v467 = vpop.f32.mrb[0].mxu0
    %v468 = vadd.f32 %v424, %v467
    %v469 = vpop.f32.mrb[0].mxu0
    %v470 = vpop.f32.mrb[0].mxu0
    %v471 = vpop.f32.mrb[0].mxu0
    %472 = vdwg.mxu0
    %vm473 = vcmask 64512
    %474 = vst.msk [vmem:[#allocation7] sm:$0xff] %vm473, %v468
    // Predicated region
    $region42: #{tpu_custom_call.1} parent=1 // pred_check
      _
    $region43: #{tpu_custom_call.1} parent=1 // pred_check_branch
      %476 = sbr.rel (0) target = $region45
    $region44: #{tpu_custom_call.1} parent=1 // pred_region
      %s478 = ssub.s32 128, 128
      %479 = vsyncadd [#allocation4], %s478
      %s481 = sshll.u32 [#allocation7], 4
      %s482 = int_to_ptr.vmem [resolvable:$true] %s481
      %484 = dma.vmem_to_hbm [thread:$0]  %s482, 128, %s8, [#allocation4]
    $region45: #{tpu_custom_call.1} parent=1 // pred_fallthru
      _
    // Predicated region
    $region46: #{tpu_custom_call.1} parent=1 // pred_check
      _
    $region47: #{tpu_custom_call.1} parent=1 // pred_check_branch
      %486 = sbr.rel (0) target = $region49
    $region48: #{tpu_custom_call.1} parent=1 // pred_region
      %487 = dma.done [#allocation4], 128
    $region49: #{tpu_custom_call.1} parent=1 // pred_fallthru
      _
    %488 = vsyncpa [#allocation3], 1
    %489 = vsyncpa [#allocation6], 1
    %490 = vsyncpa [#allocation4], 1

</llo_original>
